<compile_context>
chip_gen: v5e
topology: v5e:2x2
jax: 0.10.0
libtpu: 0.0.40
codegen_flags: <defaults>
</compile_context>

<pallas_src>
import jax
import jax.numpy as jnp
from jax.experimental import pallas as pl
from jax.experimental.pallas import tpu as pltpu


def _round_up(n, m):
    return (n + m - 1) // m * m


def _chip_config():
    """Generation-aware (vmem_capacity_bytes, lane_multiple, num_tensorcores)."""
    kind = ""
    try:
        kind = jax.devices()[0].device_kind.lower()
    except Exception:
        pass
    vmem = None
    try:
        vmem = int(pltpu.get_tpu_info().vmem_capacity_bytes)
    except Exception:
        vmem = None
    if "v5" in kind:     # v5e/v5p: 128 MiB VMEM, 4x128x128 MXU, 1 TC
        return (vmem or 128 * 2**20, 128, 1)
    if "v6" in kind:     # v6e: 128 MiB VMEM, 2x256x256 MXU, 1 TC
        return (vmem or 128 * 2**20, 256, 1)
    if "7" in kind:      # v7x: 64 MiB VMEM per TC, 2x256x256 MXU, 2 TCs
        return (vmem or 64 * 2**20, 256, 2)
    # Unknown generation: conservative defaults.
    return (vmem or 64 * 2**20, 128, 1)


def _mlp_kernel(x_ref, w1_ref, b1_ref, w2_ref, b2_ref, out_ref):
    # hidden = relu(x @ W1 + b1) -- f32 accumulation on the MXU; the hidden
    # activation and all VPU work on it stay f32.
    h = jnp.dot(x_ref[...], w1_ref[...], preferred_element_type=jnp.float32)
    h = jnp.maximum(h + b1_ref[...], 0.0)
    # out = b2 + hidden @ W2 : bias folded into the result init so that if a
    # hidden-reduction grid axis is ever added (weight-tiling TODO below), it
    # is added exactly once in the init step, never per reduction iteration.
    o = b2_ref[...] + jnp.dot(
        h.astype(w2_ref.dtype), w2_ref[...], preferred_element_type=jnp.float32
    )
    out_ref[...] = o.astype(out_ref.dtype)


def prepare_params(w1, b1, w2, b2, *, compute_dtype=jnp.bfloat16, lane_multiple=None):
    """Pad + cast parameters once (hoisted out of the per-call forward path).

    w1: (in, hidden), b1: (hidden,), w2: (hidden, out), b2: (out,).
    """
    if lane_multiple is None:
        _, lane_multiple, _ = _chip_config()
    IN, H = w1.shape
    H2, O = w2.shape
    assert H2 == H
    wd = jnp.dtype(compute_dtype) if compute_dtype is not None else jnp.dtype(w1.dtype)
    INp = _round_up(IN, 128)            # lane-dense contraction dim (MXU feed)
    Hp = _round_up(H, lane_multiple)    # 256 on v6e/v7x, 128 on v5e
    Op = _round_up(O, lane_multiple)
    w1p = jnp.pad(w1.astype(wd), ((0, INp - IN), (0, Hp - H)))
    b1p = jnp.pad(b1.astype(jnp.float32), ((0, Hp - H),)).reshape(1, Hp)
    w2p = jnp.pad(w2.astype(wd), ((0, Hp - H), (0, Op - O)))
    b2p = jnp.pad(b2.astype(jnp.float32), ((0, Op - O),)).reshape(1, Op)
    meta = dict(IN=IN, H=H, O=O, INp=INp, Hp=Hp, Op=Op, compute_dtype=wd)
    return (w1p, b1p, w2p, b2p), meta


def _forward_impl(x, params, meta, cfg, *, block_m=None, weight_buffers=1):
    w1p, b1p, w2p, b2p = params
    vmem_cap, _, num_tc = cfg
    B, IN = x.shape
    assert IN == meta["IN"], "input feature size mismatch"
    INp, Hp, Op = meta["INp"], meta["Hp"], meta["Op"]
    H, O = meta["H"], meta["O"]
    cd = meta["compute_dtype"]
    out_dtype = x.dtype
    x = x.astype(cd)

    x_item = jnp.dtype(cd).itemsize
    out_item = jnp.dtype(out_dtype).itemsize

    budget = int(vmem_cap * 0.85)       # leave headroom for compiler scratch
    wbuf = weight_buffers if weight_buffers is not None else 2
    resident = wbuf * ((INp * Hp + Hp * Op) * x_item + (Hp + Op) * 4)
    # Per batch-row VMEM: double-buffered streamed x & out tiles + f32 hidden
    # activation + f32 result tile before the output cast.
    per_row = 2 * INp * x_item + 2 * Op * out_item + Hp * 4 + Op * 4

    if block_m is None:
        # Derive the batch tile from the VMEM budget left after resident
        # weights; streaming efficiency keeps improving up to ~512-row tiles.
        tm = min(512, max(0, (budget - resident) // per_row) // 8 * 8)
    else:
        tm = _round_up(block_m, 8)
    tm = min(tm, _round_up(B, 8))
    if tm < 8:
        # TODO(synk): weight-tiling path for working sets that do not fit VMEM
        # even single-buffered: add an Op grid axis (stream W2/b2 columns) and,
        # if W1 alone still does not fit, a hidden-dim "arbitrary" reduction
        # axis with an f32 VMEM accumulator (b2 added only in the init step,
        # which the bias-fold in the kernel already anticipates).
        raise NotImplementedError(
            "FeedForwardNN weights do not fit in VMEM; weight-tiling path is "
            "not implemented yet.")

    # v7x megacore: ensure the "parallel" batch axis has >= num_tc grid steps
    # so both TensorCores get work (only when there is batch to split).
    while num_tc > 1 and B > 8 and _round_up(B, tm) // tm < num_tc and tm > 8:
        tm = max(8, _round_up(tm // 2, 8))

    Bp = _round_up(B, tm)
    grid = (Bp // tm,)

    est_vmem = resident + tm * per_row
    if est_vmem > budget:
        raise NotImplementedError(
            "FeedForwardNN working set exceeds the VMEM budget; weight-tiling "
            "path is not implemented yet.")
    vmem_limit = int(min(max(est_vmem * 5 // 4, 32 * 1024 * 1024), budget))

    xp = jnp.pad(x, ((0, Bp - B), (0, INp - IN)))

    # Advisory cost estimate (un-padded math / bytes).
    cost = pl.CostEstimate(
        flops=2 * B * (IN * H + H * O),
        transcendentals=0,
        bytes_accessed=(
            B * IN * x_item
            + (IN * H + H * O) * x_item
            + (H + O) * 4
            + B * O * out_item
        ),
    )

    def _w_spec(shape):
        # Constant index_map -> fetched once, VMEM-resident for every batch
        # grid step; Buffered(1) halves resident weight VMEM.
        if weight_buffers is None:
            return pl.BlockSpec(shape, lambda i: (0, 0))
        return pl.BlockSpec(shape, lambda i: (0, 0),
                            pipeline_mode=pl.Buffered(weight_buffers))

    out_padded = pl.pallas_call(
        _mlp_kernel,
        out_shape=jax.ShapeDtypeStruct((Bp, Op), out_dtype),
        grid_spec=pl.GridSpec(
            grid=grid,
            in_specs=[
                # Streamed batch tile.  TODO(synk): if profiling shows exposed
                # DMA at real sizes, sweep pipeline_mode=pl.Buffered(3) here
                # and on out_specs.
                pl.BlockSpec((tm, INp), lambda i: (i, 0)),
                _w_spec((INp, Hp)),
                _w_spec((1, Hp)),
                _w_spec((Hp, Op)),
                _w_spec((1, Op)),
            ],
            out_specs=pl.BlockSpec((tm, Op), lambda i: (i, 0)),
        ),
        compiler_params=pltpu.CompilerParams(
            # Batch tiles are independent -> shardable across TCs (v7x megacore).
            dimension_semantics=("parallel",),
            vmem_limit_bytes=vmem_limit,
        ),
        cost_estimate=cost,
    )(xp, w1p, b1p, w2p, b2p)

    # Strip batch / output-lane padding.
    return out_padded[:B, :O]


def make_feedforward(w1, b1, w2, b2, *, compute_dtype=jnp.bfloat16, block_m=None):
    """Pre-pad / pre-cast weights once and return forward(x)."""
    cfg = _chip_config()
    params, meta = prepare_params(
        w1, b1, w2, b2, compute_dtype=compute_dtype, lane_multiple=cfg[1])

    def forward(x):
        try:
            return _forward_impl(x, params, meta, cfg, block_m=block_m,
                                 weight_buffers=1)
        except NotImplementedError:
            raise
        except Exception:
            # JAX builds / backends that reject pipeline_mode=pl.Buffered(1):
            # fall back to default (double-buffered) weight blocks.
            return _forward_impl(x, params, meta, cfg, block_m=block_m,
                                 weight_buffers=None)

    return forward


def feedforward_nn(x, w1, b1, w2, b2, *, compute_dtype=jnp.bfloat16, block_m=None):
    """One-shot convenience wrapper (pads weights per call; prefer make_feedforward)."""
    return make_feedforward(w1, b1, w2, b2, compute_dtype=compute_dtype,
                            block_m=block_m)(x)


def init_params(key, input_size, hidden_size, output_size):
    """Deterministic init matching PyTorch nn.Linear (weights stored transposed)."""
    k1, k2, k3, k4 = jax.random.split(key, 4)
    bound1 = 1.0 / (input_size ** 0.5)
    bound2 = 1.0 / (hidden_size ** 0.5)
    w1 = jax.random.uniform(k1, (input_size, hidden_size), jnp.float32, -bound1, bound1)
    b1 = jax.random.uniform(k2, (hidden_size,), jnp.float32, -bound1, bound1)
    w2 = jax.random.uniform(k3, (hidden_size, output_size), jnp.float32, -bound2, bound2)
    b2 = jax.random.uniform(k4, (output_size,), jnp.float32, -bound2, bound2)
    return w1, b1, w2, b2


if __name__ == "__main__":
    input_size, hidden_size, output_size = 16, 32, 8
    batch = 4

    key = jax.random.PRNGKey(0)
    kx, kp = jax.random.split(key)
    x = jax.random.normal(kx, (batch, input_size), jnp.float32)
    w1, b1, w2, b2 = init_params(kp, input_size, hidden_size, output_size)

    # Pure-JAX reference (same math as the PyTorch forward).
    ref = jnp.maximum(x @ w1 + b1, 0.0) @ w2 + b2

    # Default fast path: bf16 MXU compute, f32 accumulation (looser tolerance).
    fwd_bf16 = make_feedforward(w1, b1, w2, b2)
    out_bf16 = fwd_bf16(x)
    jax.block_until_ready(out_bf16)
    assert out_bf16.shape == (batch, output_size)
    assert jnp.allclose(out_bf16, ref, atol=2e-2, rtol=2e-2)

    # Strict-precision path (f32 end-to-end) for exact numeric validation.
    out_f32 = feedforward_nn(x, w1, b1, w2, b2, compute_dtype=None)
    jax.block_until_ready(out_f32)
    assert out_f32.shape == (batch, output_size)
    assert jnp.allclose(out_f32, ref, atol=1e-5, rtol=1e-5)

    print("KERNEL_OK")
</pallas_src>

<mosaic_0001>
module attributes {stable_mosaic.version = 11 : i64} {
  func.func @_mlp_kernel(%arg0: i32, %arg1: memref<8x128xbf16, #tpu.memory_space<vmem>>, %arg2: memref<128x128xbf16, #tpu.memory_space<vmem>>, %arg3: memref<1x128xf32, #tpu.memory_space<vmem>>, %arg4: memref<128x128xbf16, #tpu.memory_space<vmem>>, %arg5: memref<1x128xf32, #tpu.memory_space<vmem>>, %arg6: memref<8x128xf32, #tpu.memory_space<vmem>>) attributes {dimension_semantics = [#tpu.dimension_semantics<parallel>], iteration_bounds = array<i64: 1>, scalar_prefetch = 0 : i64, scratch_operands = 0 : i64, tpu.core_type = #tpu.core_type<tc>, window_params = [{transform_indices = @transform_0, window_bounds = array<i64: 8, 128>}, {pipeline_mode = #tpu.pipeline_mode<synchronous>, transform_indices = @transform_1, window_bounds = array<i64: 128, 128>}, {pipeline_mode = #tpu.pipeline_mode<synchronous>, transform_indices = @transform_2, window_bounds = array<i64: 1, 128>}, {pipeline_mode = #tpu.pipeline_mode<synchronous>, transform_indices = @transform_3, window_bounds = array<i64: 128, 128>}, {pipeline_mode = #tpu.pipeline_mode<synchronous>, transform_indices = @transform_4, window_bounds = array<i64: 1, 128>}, {transform_indices = @transform_5, window_bounds = array<i64: 8, 128>}]} {
    %c0 = arith.constant 0 : index
    %c0_0 = arith.constant 0 : index
    %0 = vector.load %arg1[%c0, %c0_0] : memref<8x128xbf16, #tpu.memory_space<vmem>>, vector<8x128xbf16>
    %c0_1 = arith.constant 0 : index
    %c0_2 = arith.constant 0 : index
    %1 = vector.load %arg2[%c0_1, %c0_2] : memref<128x128xbf16, #tpu.memory_space<vmem>>, vector<128x128xbf16>
    %cst = arith.constant dense<0.000000e+00> : vector<8x128xf32>
    %2 = tpu.matmul %0, %1, %cst {dimension_numbers = #tpu.dot_dimension_numbers<[1], [0], [0], [1], [0, 0, 1, 1], [], []>} : vector<8x128xbf16>, vector<128x128xbf16>, vector<8x128xf32> -> vector<8x128xf32>
    %c0_3 = arith.constant 0 : index
    %c0_4 = arith.constant 0 : index
    %3 = vector.load %arg3[%c0_3, %c0_4] : memref<1x128xf32, #tpu.memory_space<vmem>>, vector<1x128xf32>
    %4 = vector.broadcast %3 : vector<1x128xf32> to vector<8x128xf32>
    %5 = arith.addf %2, %4 : vector<8x128xf32>
    %cst_5 = arith.constant 0.000000e+00 : f32
    %6 = vector.broadcast %cst_5 : f32 to vector<8x128xf32>
    %7 = arith.maximumf %5, %6 : vector<8x128xf32>
    %c0_6 = arith.constant 0 : index
    %c0_7 = arith.constant 0 : index
    %8 = vector.load %arg5[%c0_6, %c0_7] : memref<1x128xf32, #tpu.memory_space<vmem>>, vector<1x128xf32>
    %9 = arith.truncf %7 : vector<8x128xf32> to vector<8x128xbf16>
    %c0_8 = arith.constant 0 : index
    %c0_9 = arith.constant 0 : index
    %10 = vector.load %arg4[%c0_8, %c0_9] : memref<128x128xbf16, #tpu.memory_space<vmem>>, vector<128x128xbf16>
    %cst_10 = arith.constant dense<0.000000e+00> : vector<8x128xf32>
    %11 = tpu.matmul %9, %10, %cst_10 {dimension_numbers = #tpu.dot_dimension_numbers<[1], [0], [0], [1], [0, 0, 1, 1], [], []>} : vector<8x128xbf16>, vector<128x128xbf16>, vector<8x128xf32> -> vector<8x128xf32>
    %12 = vector.broadcast %8 : vector<1x128xf32> to vector<8x128xf32>
    %13 = arith.addf %12, %11 : vector<8x128xf32>
    %c0_11 = arith.constant 0 : index
    %c0_12 = arith.constant 0 : index
    %14 = vector.load %arg6[%c0_11, %c0_12] : memref<8x128xf32, #tpu.memory_space<vmem>>, vector<8x128xf32>
    tpu.vector_store %arg6[%c0_11, %c0_12], %13 {strides = array<i32>} : memref<8x128xf32, #tpu.memory_space<vmem>>, vector<8x128xf32>,
    return
  }
  func.func @transform_0(%arg0: i32) -> (i32, i32) {
    %c0_i32 = arith.constant 0 : i32
    %c0_i32_0 = arith.constant 0 : i32
    return %arg0, %c0_i32 : i32, i32
  }
  func.func @transform_1(%arg0: i32) -> (i32, i32) {
    %c0_i32 = arith.constant 0 : i32
    %c0_i32_0 = arith.constant 0 : i32
    %c0_i32_1 = arith.constant 0 : i32
    return %c0_i32, %c0_i32_0 : i32, i32
  }
  func.func @transform_2(%arg0: i32) -> (i32, i32) {
    %c0_i32 = arith.constant 0 : i32
    %c0_i32_0 = arith.constant 0 : i32
    %c0_i32_1 = arith.constant 0 : i32
    return %c0_i32, %c0_i32_0 : i32, i32
  }
  func.func @transform_3(%arg0: i32) -> (i32, i32) {
    %c0_i32 = arith.constant 0 : i32
    %c0_i32_0 = arith.constant 0 : i32
    %c0_i32_1 = arith.constant 0 : i32
    return %c0_i32, %c0_i32_0 : i32, i32
  }
  func.func @transform_4(%arg0: i32) -> (i32, i32) {
    %c0_i32 = arith.constant 0 : i32
    %c0_i32_0 = arith.constant 0 : i32
    %c0_i32_1 = arith.constant 0 : i32
    return %c0_i32, %c0_i32_0 : i32, i32
  }
  func.func @transform_5(%arg0: i32) -> (i32, i32) {
    %c0_i32 = arith.constant 0 : i32
    %c0_i32_0 = arith.constant 0 : i32
    return %arg0, %c0_i32 : i32, i32
  }
}

module attributes {stable_mosaic.version = 11 : i64} {
  func.func @_mlp_kernel(%arg0: i32, %arg1: memref<8x128xbf16, #tpu.memory_space<vmem>>, %arg2: memref<128x128xbf16, #tpu.memory_space<vmem>>, %arg3: memref<1x128xf32, #tpu.memory_space<vmem>>, %arg4: memref<128x128xbf16, #tpu.memory_space<vmem>>, %arg5: memref<1x128xf32, #tpu.memory_space<vmem>>, %arg6: memref<8x128xf32, #tpu.memory_space<vmem>>) attributes {dimension_semantics = [#tpu.dimension_semantics<parallel>], iteration_bounds = array<i64: 1>, scalar_prefetch = 0 : i64, scratch_operands = 0 : i64, tpu.core_type = #tpu.core_type<tc>, window_params = [{transform_indices = @transform_0, window_bounds = array<i64: 8, 128>}, {pipeline_mode = #tpu.pipeline_mode<synchronous>, transform_indices = @transform_1, window_bounds = array<i64: 128, 128>}, {pipeline_mode = #tpu.pipeline_mode<synchronous>, transform_indices = @transform_2, window_bounds = array<i64: 1, 128>}, {pipeline_mode = #tpu.pipeline_mode<synchronous>, transform_indices = @transform_3, window_bounds = array<i64: 128, 128>}, {pipeline_mode = #tpu.pipeline_mode<synchronous>, transform_indices = @transform_4, window_bounds = array<i64: 1, 128>}, {transform_indices = @transform_5, window_bounds = array<i64: 8, 128>}]} {
    %c0 = arith.constant 0 : index
    %c0_0 = arith.constant 0 : index
    %0 = vector.load %arg1[%c0, %c0_0] : memref<8x128xbf16, #tpu.memory_space<vmem>>, vector<8x128xbf16>
    %c0_1 = arith.constant 0 : index
    %c0_2 = arith.constant 0 : index
    %1 = vector.load %arg2[%c0_1, %c0_2] : memref<128x128xbf16, #tpu.memory_space<vmem>>, vector<128x128xbf16>
    %cst = arith.constant dense<0.000000e+00> : vector<8x128xf32>
    %2 = tpu.matmul %0, %1, %cst {dimension_numbers = #tpu.dot_dimension_numbers<[1], [0], [0], [1], [0, 0, 1, 1], [], []>} : vector<8x128xbf16>, vector<128x128xbf16>, vector<8x128xf32> -> vector<8x128xf32>
    %c0_3 = arith.constant 0 : index
    %c0_4 = arith.constant 0 : index
    %3 = vector.load %arg3[%c0_3, %c0_4] : memref<1x128xf32, #tpu.memory_space<vmem>>, vector<1x128xf32>
    %4 = vector.broadcast %3 : vector<1x128xf32> to vector<8x128xf32>
    %5 = arith.addf %2, %4 : vector<8x128xf32>
    %cst_5 = arith.constant 0.000000e+00 : f32
    %6 = vector.broadcast %cst_5 : f32 to vector<8x128xf32>
    %7 = arith.maximumf %5, %6 : vector<8x128xf32>
    %c0_6 = arith.constant 0 : index
    %c0_7 = arith.constant 0 : index
    %8 = vector.load %arg5[%c0_6, %c0_7] : memref<1x128xf32, #tpu.memory_space<vmem>>, vector<1x128xf32>
    %9 = arith.truncf %7 : vector<8x128xf32> to vector<8x128xbf16>
    %c0_8 = arith.constant 0 : index
    %c0_9 = arith.constant 0 : index
    %10 = vector.load %arg4[%c0_8, %c0_9] : memref<128x128xbf16, #tpu.memory_space<vmem>>, vector<128x128xbf16>
    %cst_10 = arith.constant dense<0.000000e+00> : vector<8x128xf32>
    %11 = tpu.matmul %9, %10, %cst_10 {dimension_numbers = #tpu.dot_dimension_numbers<[1], [0], [0], [1], [0, 0, 1, 1], [], []>} : vector<8x128xbf16>, vector<128x128xbf16>, vector<8x128xf32> -> vector<8x128xf32>
    %12 = vector.broadcast %8 : vector<1x128xf32> to vector<8x128xf32>
    %13 = arith.addf %12, %11 : vector<8x128xf32>
    %c0_11 = arith.constant 0 : index
    %c0_12 = arith.constant 0 : index
    %14 = vector.load %arg6[%c0_11, %c0_12] : memref<8x128xf32, #tpu.memory_space<vmem>>, vector<8x128xf32>
    tpu.vector_store %arg6[%c0_11, %c0_12], %13 {strides = array<i32>} : memref<8x128xf32, #tpu.memory_space<vmem>>, vector<8x128xf32>,
    return
  }
  func.func @transform_0(%arg0: i32) -> (i32, i32) {
    %c0_i32 = arith.constant 0 : i32
    %c0_i32_0 = arith.constant 0 : i32
    return %arg0, %c0_i32 : i32, i32
  }
  func.func @transform_1(%arg0: i32) -> (i32, i32) {
    %c0_i32 = arith.constant 0 : i32
    %c0_i32_0 = arith.constant 0 : i32
    %c0_i32_1 = arith.constant 0 : i32
    return %c0_i32, %c0_i32_0 : i32, i32
  }
  func.func @transform_2(%arg0: i32) -> (i32, i32) {
    %c0_i32 = arith.constant 0 : i32
    %c0_i32_0 = arith.constant 0 : i32
    %c0_i32_1 = arith.constant 0 : i32
    return %c0_i32, %c0_i32_0 : i32, i32
  }
  func.func @transform_3(%arg0: i32) -> (i32, i32) {
    %c0_i32 = arith.constant 0 : i32
    %c0_i32_0 = arith.constant 0 : i32
    %c0_i32_1 = arith.constant 0 : i32
    return %c0_i32, %c0_i32_0 : i32, i32
  }
  func.func @transform_4(%arg0: i32) -> (i32, i32) {
    %c0_i32 = arith.constant 0 : i32
    %c0_i32_0 = arith.constant 0 : i32
    %c0_i32_1 = arith.constant 0 : i32
    return %c0_i32, %c0_i32_0 : i32, i32
  }
  func.func @transform_5(%arg0: i32) -> (i32, i32) {
    %c0_i32 = arith.constant 0 : i32
    %c0_i32_0 = arith.constant 0 : i32
    return %arg0, %c0_i32 : i32, i32
  }
}

</mosaic_0001>

<llo_original>
// kernel: tpu_custom_call.1
$region0: #{tpu_custom_call.1}
  #allocation0 [shape = 'u32[]', space=smem, size = 0x4, offset = 0x4, fixed_abs, tag = 'smem constant byte address 0x4 - core index']
  #allocation1 [shape = 'u32[72,128]{1,0:T(1,128)}', space=vmem, size = 0x9000, scoped, tag = 'internal scratch']
  %s0 = inlined_call_operand.hbm [shape: bf16[8,128], index: 0, kind: input, shape index: {}]
  %s1 = inlined_call_operand.hbm [shape: bf16[128,128], index: 1, kind: input, shape index: {}]
  %s2 = inlined_call_operand.vmem [shape: f32[1,128], index: 2, kind: input, shape index: {}]
  %s3 = inlined_call_operand.hbm [shape: bf16[128,128], index: 3, kind: input, shape index: {}]
  %s4 = inlined_call_operand.vmem [shape: f32[1,128], index: 4, kind: input, shape index: {}]
  %s5 = inlined_call_operand.hbm [shape: f32[8,128], index: 5, kind: output, shape index: {}]
  %s6 = sld [smem:[#allocation0]]
  $region42: #{tpu_custom_call.1} parent=0
    _
  %s8 = ssub.s32 1, %s6
  %s9 = scalar_select 0, %s8, %s6
  $region1: #{tpu_custom_call.1} parent=0
    #allocation2 [shape = 'u8[2048]{0}', space=vmem, size = 0x800, scoped, tag = 'input window, operand 0, single buffered']
    #allocation3 [shape = 's32[1]{0}', space=sflag, size = 0x4, scoped, tag = 'scoped memory for tpu_custom_call.1']
    #allocation4 [shape = 's32[1]{0}', space=sflag, size = 0x4, scoped, tag = 'scoped memory for tpu_custom_call.1']
    #allocation5 [shape = 'u8[32768]{0}', space=vmem, size = 0x8000, scoped, tag = 'input window, operand 1, single buffered']
    #allocation6 [shape = 's32[1]{0}', space=sflag, size = 0x4, scoped, tag = 'scoped memory for tpu_custom_call.1']
    #allocation7 [shape = 'u8[32768]{0}', space=vmem, size = 0x8000, scoped, tag = 'input window, operand 3, single buffered']
    #allocation8 [shape = 'u8[4096]{0}', space=vmem, size = 0x1000, scoped, tag = 'output window, operand 0, single buffered']
    %10 = vsyncpa [#allocation3], 0
    %11 = vsyncpa [#allocation6], 0
    %12 = vsyncpa [#allocation4], 0
    // Predicated region
    $region2: #{tpu_custom_call.1} parent=1 // pred_check
      _
    $region3: #{tpu_custom_call.1} parent=1 // pred_check_branch
      %14 = sbr.rel (0) target = $region5
    $region4: #{tpu_custom_call.1} parent=1 // pred_region
      %16 = vsyncadd [#allocation3], 0
      %s18 = sshll.u32 %s0, 4
      %s19 = int_to_ptr.hbm [resolvable:$true] %s18
      %s20 = sshll.u32 [#allocation2], 4
      %s21 = int_to_ptr.vmem [resolvable:$true] %s20
      %23 = dma.hbm_to_vmem [thread:$0]  %s19, 64, %s21, [#allocation3]
    $region5: #{tpu_custom_call.1} parent=1 // pred_fallthru
      _
    // Predicated region
    $region6: #{tpu_custom_call.1} parent=1 // pred_check
      _
    $region7: #{tpu_custom_call.1} parent=1 // pred_check_branch
      %25 = sbr.rel (0) target = $region9
    $region8: #{tpu_custom_call.1} parent=1 // pred_region
      %27 = vsyncadd [#allocation6], 0
      %s28 = sshll.u32 %s1, 4
      %s29 = int_to_ptr.hbm [resolvable:$true] %s28
      %s30 = sshll.u32 [#allocation5], 4
      %s31 = int_to_ptr.vmem [resolvable:$true] %s30
      %36 = dma.hbm_to_vmem [thread:$0]  %s29, 1024, %s31, [#allocation6], 64, 64, 4
    $region9: #{tpu_custom_call.1} parent=1 // pred_fallthru
      _
    // Predicated region
    $region10: #{tpu_custom_call.1} parent=1 // pred_check
      _
    $region11: #{tpu_custom_call.1} parent=1 // pred_check_branch
      %38 = sbr.rel (0) target = $region13
    $region12: #{tpu_custom_call.1} parent=1 // pred_region
      _
    $region13: #{tpu_custom_call.1} parent=1 // pred_fallthru
      _
    // Predicated region
    $region14: #{tpu_custom_call.1} parent=1 // pred_check
      _
    $region15: #{tpu_custom_call.1} parent=1 // pred_check_branch
      %40 = sbr.rel (0) target = $region17
    $region16: #{tpu_custom_call.1} parent=1 // pred_region
      %42 = vsyncadd [#allocation6], 0
      %s43 = sshll.u32 %s3, 4
      %s44 = int_to_ptr.hbm [resolvable:$true] %s43
      %s45 = sshll.u32 [#allocation7], 4
      %s46 = int_to_ptr.vmem [resolvable:$true] %s45
      %51 = dma.hbm_to_vmem [thread:$0]  %s44, 1024, %s46, [#allocation6], 64, 64, 4
    $region17: #{tpu_custom_call.1} parent=1 // pred_fallthru
      _
    // Predicated region
    $region18: #{tpu_custom_call.1} parent=1 // pred_check
      _
    $region19: #{tpu_custom_call.1} parent=1 // pred_check_branch
      %53 = sbr.rel (0) target = $region21
    $region20: #{tpu_custom_call.1} parent=1 // pred_region
      _
    $region21: #{tpu_custom_call.1} parent=1 // pred_fallthru
      _
    // Predicated region
    $region22: #{tpu_custom_call.1} parent=1 // pred_check
      _
    $region23: #{tpu_custom_call.1} parent=1 // pred_check_branch
      %55 = sbr.rel (0) target = $region25
    $region24: #{tpu_custom_call.1} parent=1 // pred_region
      %57 = dma.done [#allocation3], 64
    $region25: #{tpu_custom_call.1} parent=1 // pred_fallthru
      _
    // Predicated region
    $region26: #{tpu_custom_call.1} parent=1 // pred_check
      _
    $region27: #{tpu_custom_call.1} parent=1 // pred_check_branch
      %59 = sbr.rel (0) target = $region29
    $region28: #{tpu_custom_call.1} parent=1 // pred_region
      %61 = dma.done [#allocation6], 1024
    $region29: #{tpu_custom_call.1} parent=1 // pred_fallthru
      _
    // Predicated region
    $region30: #{tpu_custom_call.1} parent=1 // pred_check
      _
    $region31: #{tpu_custom_call.1} parent=1 // pred_check_branch
      %63 = sbr.rel (0) target = $region33
    $region32: #{tpu_custom_call.1} parent=1 // pred_region
      %65 = dma.done [#allocation6], 1024
    $region33: #{tpu_custom_call.1} parent=1 // pred_fallthru
      _
    %v66 = vld [vmem:[#allocation2] sm:$0xf]
    %v67 = vld [vmem:[#allocation5] sm:$0xf]
    %v68 = vld [vmem:[#allocation5 + $0x4] sm:$0xf]
    %v69 = vld [vmem:[#allocation5 + $0x8] sm:$0xf]
    %v70 = vld [vmem:[#allocation5 + $0xc] sm:$0xf]
    %v71 = vld [vmem:[#allocation5 + $0x10] sm:$0xf]
    %v72 = vld [vmem:[#allocation5 + $0x14] sm:$0xf]
    %v73 = vld [vmem:[#allocation5 + $0x18] sm:$0xf]
    %v74 = vld [vmem:[#allocation5 + $0x1c] sm:$0xf]
    %v75 = vld [vmem:[#allocation5 + $0x20] sm:$0xf]
    %v76 = vld [vmem:[#allocation5 + $0x24] sm:$0xf]
    %v77 = vld [vmem:[#allocation5 + $0x28] sm:$0xf]
    %v78 = vld [vmem:[#allocation5 + $0x2c] sm:$0xf]
    %v79 = vld [vmem:[#allocation5 + $0x30] sm:$0xf]
    %v80 = vld [vmem:[#allocation5 + $0x34] sm:$0xf]
    %v81 = vld [vmem:[#allocation5 + $0x38] sm:$0xf]
    %v82 = vld [vmem:[#allocation5 + $0x3c] sm:$0xf]
    %v83 = vld [vmem:[%s2] sm:$0x1]
    %v85 = vperm.slane %v83, 0
    %v103 = vunpack.c.l.b16 %v67
    %v104 = vunpack.c.l.b16 %v68
    %v105 = vunpack.c.l.b16 %v69
    %v106 = vunpack.c.l.b16 %v70
    %v107 = vunpack.c.l.b16 %v71
    %v108 = vunpack.c.l.b16 %v72
    %v109 = vunpack.c.l.b16 %v73
    %v110 = vunpack.c.l.b16 %v74
    %v111 = vunpack.c.l.b16 %v75
    %v112 = vunpack.c.l.b16 %v76
    %v113 = vunpack.c.l.b16 %v77
    %v114 = vunpack.c.l.b16 %v78
    %v115 = vunpack.c.l.b16 %v79
    %v116 = vunpack.c.l.b16 %v80
    %v117 = vunpack.c.l.b16 %v81
    %v118 = vunpack.c.l.b16 %v82
    %v119 = vpack.c.b16 %v104, %v103
    %v120 = vpack.c.b16 %v106, %v105
    %v121 = vpack.c.b16 %v108, %v107
    %v122 = vpack.c.b16 %v110, %v109
    %v123 = vpack.c.b16 %v112, %v111
    %v124 = vpack.c.b16 %v114, %v113
    %v125 = vpack.c.b16 %v116, %v115
    %v126 = vpack.c.b16 %v118, %v117
    %135 = vmatpush.bf16.msra.mxu0 %v126
    %136 = vmatpush.bf16.msra.mxu0 %v125
    %137 = vmatpush.bf16.msra.mxu0 %v124
    %138 = vmatpush.bf16.msra.mxu0 %v123
    %139 = vmatpush.bf16.msra.mxu0 %v122
    %140 = vmatpush.bf16.msra.mxu0 %v121
    %141 = vmatpush.bf16.msra.mxu0 %v120
    %142 = vmatpush.bf16.msra.mxu0 %v119
    %143 = vmatmul.bf16.gmra.mxu0 %v66
    %v144 = vpop.f32.mrf.mxu0
    %v145 = vadd.f32 %v85, %v144
    %v146 = vpop.f32.mrf.mxu0
    %147 = vdwg.mxu0
    %v148 = vmax.f32 %v145, 0.0
    %v149 = vld [vmem:[%s4] sm:$0x1]
    %v150 = vpack.c.bf16 %v148, %v148
    %v151 = vld [vmem:[#allocation7] sm:$0xf]
    %v152 = vld [vmem:[#allocation7 + $0x4] sm:$0xf]
    %v153 = vld [vmem:[#allocation7 + $0x8] sm:$0xf]
    %v154 = vld [vmem:[#allocation7 + $0xc] sm:$0xf]
    %v155 = vld [vmem:[#allocation7 + $0x10] sm:$0xf]
    %v156 = vld [vmem:[#allocation7 + $0x14] sm:$0xf]
    %v157 = vld [vmem:[#allocation7 + $0x18] sm:$0xf]
    %v158 = vld [vmem:[#allocation7 + $0x1c] sm:$0xf]
    %v159 = vld [vmem:[#allocation7 + $0x20] sm:$0xf]
    %v160 = vld [vmem:[#allocation7 + $0x24] sm:$0xf]
    %v161 = vld [vmem:[#allocation7 + $0x28] sm:$0xf]
    %v162 = vld [vmem:[#allocation7 + $0x2c] sm:$0xf]
    %v163 = vld [vmem:[#allocation7 + $0x30] sm:$0xf]
    %v164 = vld [vmem:[#allocation7 + $0x34] sm:$0xf]
    %v165 = vld [vmem:[#allocation7 + $0x38] sm:$0xf]
    %v166 = vld [vmem:[#allocation7 + $0x3c] sm:$0xf]
    %v183 = vunpack.c.l.b16 %v151
    %v184 = vunpack.c.l.b16 %v152
    %v185 = vunpack.c.l.b16 %v153
    %v186 = vunpack.c.l.b16 %v154
    %v187 = vunpack.c.l.b16 %v155
    %v188 = vunpack.c.l.b16 %v156
    %v189 = vunpack.c.l.b16 %v157
    %v190 = vunpack.c.l.b16 %v158
    %v191 = vunpack.c.l.b16 %v159
    %v192 = vunpack.c.l.b16 %v160
    %v193 = vunpack.c.l.b16 %v161
    %v194 = vunpack.c.l.b16 %v162
    %v195 = vunpack.c.l.b16 %v163
    %v196 = vunpack.c.l.b16 %v164
    %v197 = vunpack.c.l.b16 %v165
    %v198 = vunpack.c.l.b16 %v166
    %v199 = vpack.c.b16 %v184, %v183
    %v200 = vpack.c.b16 %v186, %v185
    %v201 = vpack.c.b16 %v188, %v187
    %v202 = vpack.c.b16 %v190, %v189
    %v203 = vpack.c.b16 %v192, %v191
    %v204 = vpack.c.b16 %v194, %v193
    %v205 = vpack.c.b16 %v196, %v195
    %v206 = vpack.c.b16 %v198, %v197
    %215 = vmatpush.bf16.msra.mxu0 %v206
    %216 = vmatpush.bf16.msra.mxu0 %v205
    %217 = vmatpush.bf16.msra.mxu0 %v204
    %218 = vmatpush.bf16.msra.mxu0 %v203
    %219 = vmatpush.bf16.msra.mxu0 %v202
    %220 = vmatpush.bf16.msra.mxu0 %v201
    %221 = vmatpush.bf16.msra.mxu0 %v200
    %222 = vmatpush.bf16.msra.mxu0 %v199
    %223 = vmatmul.bf16.gmra.mxu0 %v150
    %v224 = vpop.f32.mrf.mxu0
    %v225 = vadd.f32 0.0, %v224
    %v226 = vpop.f32.mrf.mxu0
    %227 = vdwg.mxu0
    %v229 = vperm.slane %v149, 0
    %v231 = vadd.f32 %v229, %v225
    %232 = vst [vmem:[#allocation8] sm:$0xff] %v231
    // Predicated region
    $region34: #{tpu_custom_call.1} parent=1 // pred_check
      _
    $region35: #{tpu_custom_call.1} parent=1 // pred_check_branch
      %234 = sbr.rel (0) target = $region37
    $region36: #{tpu_custom_call.1} parent=1 // pred_region
      %236 = vsyncadd [#allocation4], 0
      %s238 = sshll.u32 [#allocation8], 4
      %s239 = int_to_ptr.vmem [resolvable:$true] %s238
      %s240 = sshll.u32 %s5, 4
      %s241 = int_to_ptr.hbm [resolvable:$true] %s240
      %243 = dma.vmem_to_hbm [thread:$0]  %s239, 128, %s241, [#allocation4]
    $region37: #{tpu_custom_call.1} parent=1 // pred_fallthru
      _
    // Predicated region
    $region38: #{tpu_custom_call.1} parent=1 // pred_check
      _
    $region39: #{tpu_custom_call.1} parent=1 // pred_check_branch
      %245 = sbr.rel (0) target = $region41
    $region40: #{tpu_custom_call.1} parent=1 // pred_region
      %247 = dma.done [#allocation4], 128
    $region41: #{tpu_custom_call.1} parent=1 // pred_fallthru
      _
    %248 = vsyncpa [#allocation3], 1
    %249 = vsyncpa [#allocation6], 1
    %250 = vsyncpa [#allocation4], 1

// kernel: tpu_custom_call.1
$region0: #{tpu_custom_call.1}
  #allocation0 [shape = 'u32[]', space=smem, size = 0x4, offset = 0x4, fixed_abs, tag = 'smem constant byte address 0x4 - core index']
  #allocation1 [shape = 'u32[72,128]{1,0:T(1,128)}', space=vmem, size = 0x9000, scoped, tag = 'internal scratch']
  %s0 = inlined_call_operand.hbm [shape: bf16[8,128], index: 0, kind: input, shape index: {}]
  %s1 = inlined_call_operand.hbm [shape: bf16[128,128], index: 1, kind: input, shape index: {}]
  %s2 = inlined_call_operand.vmem [shape: f32[1,128], index: 2, kind: input, shape index: {}]
  %s3 = inlined_call_operand.hbm [shape: bf16[128,128], index: 3, kind: input, shape index: {}]
  %s4 = inlined_call_operand.vmem [shape: f32[1,128], index: 4, kind: input, shape index: {}]
  %s5 = inlined_call_operand.hbm [shape: f32[8,128], index: 5, kind: output, shape index: {}]
  %s6 = sld [smem:[#allocation0]]
  $region42: #{tpu_custom_call.1} parent=0
    _
  %s8 = ssub.s32 1, %s6
  %s9 = scalar_select 0, %s8, %s6
  $region1: #{tpu_custom_call.1} parent=0
    #allocation2 [shape = 'u8[2048]{0}', space=vmem, size = 0x800, scoped, tag = 'input window, operand 0, single buffered']
    #allocation3 [shape = 's32[1]{0}', space=sflag, size = 0x4, scoped, tag = 'scoped memory for tpu_custom_call.1']
    #allocation4 [shape = 's32[1]{0}', space=sflag, size = 0x4, scoped, tag = 'scoped memory for tpu_custom_call.1']
    #allocation5 [shape = 'u8[32768]{0}', space=vmem, size = 0x8000, scoped, tag = 'input window, operand 1, single buffered']
    #allocation6 [shape = 's32[1]{0}', space=sflag, size = 0x4, scoped, tag = 'scoped memory for tpu_custom_call.1']
    #allocation7 [shape = 'u8[32768]{0}', space=vmem, size = 0x8000, scoped, tag = 'input window, operand 3, single buffered']
    #allocation8 [shape = 'u8[4096]{0}', space=vmem, size = 0x1000, scoped, tag = 'output window, operand 0, single buffered']
    %10 = vsyncpa [#allocation3], 0
    %11 = vsyncpa [#allocation6], 0
    %12 = vsyncpa [#allocation4], 0
    // Predicated region
    $region2: #{tpu_custom_call.1} parent=1 // pred_check
      _
    $region3: #{tpu_custom_call.1} parent=1 // pred_check_branch
      %14 = sbr.rel (0) target = $region5
    $region4: #{tpu_custom_call.1} parent=1 // pred_region
      %16 = vsyncadd [#allocation3], 0
      %s18 = sshll.u32 %s0, 4
      %s19 = int_to_ptr.hbm [resolvable:$true] %s18
      %s20 = sshll.u32 [#allocation2], 4
      %s21 = int_to_ptr.vmem [resolvable:$true] %s20
      %23 = dma.hbm_to_vmem [thread:$0]  %s19, 64, %s21, [#allocation3]
    $region5: #{tpu_custom_call.1} parent=1 // pred_fallthru
      _
    // Predicated region
    $region6: #{tpu_custom_call.1} parent=1 // pred_check
      _
    $region7: #{tpu_custom_call.1} parent=1 // pred_check_branch
      %25 = sbr.rel (0) target = $region9
    $region8: #{tpu_custom_call.1} parent=1 // pred_region
      %27 = vsyncadd [#allocation6], 0
      %s28 = sshll.u32 %s1, 4
      %s29 = int_to_ptr.hbm [resolvable:$true] %s28
      %s30 = sshll.u32 [#allocation5], 4
      %s31 = int_to_ptr.vmem [resolvable:$true] %s30
      %36 = dma.hbm_to_vmem [thread:$0]  %s29, 1024, %s31, [#allocation6], 64, 64, 4
    $region9: #{tpu_custom_call.1} parent=1 // pred_fallthru
      _
    // Predicated region
    $region10: #{tpu_custom_call.1} parent=1 // pred_check
      _
    $region11: #{tpu_custom_call.1} parent=1 // pred_check_branch
      %38 = sbr.rel (0) target = $region13
    $region12: #{tpu_custom_call.1} parent=1 // pred_region
      _
    $region13: #{tpu_custom_call.1} parent=1 // pred_fallthru
      _
    // Predicated region
    $region14: #{tpu_custom_call.1} parent=1 // pred_check
      _
    $region15: #{tpu_custom_call.1} parent=1 // pred_check_branch
      %40 = sbr.rel (0) target = $region17
    $region16: #{tpu_custom_call.1} parent=1 // pred_region
      %42 = vsyncadd [#allocation6], 0
      %s43 = sshll.u32 %s3, 4
      %s44 = int_to_ptr.hbm [resolvable:$true] %s43
      %s45 = sshll.u32 [#allocation7], 4
      %s46 = int_to_ptr.vmem [resolvable:$true] %s45
      %51 = dma.hbm_to_vmem [thread:$0]  %s44, 1024, %s46, [#allocation6], 64, 64, 4
    $region17: #{tpu_custom_call.1} parent=1 // pred_fallthru
      _
    // Predicated region
    $region18: #{tpu_custom_call.1} parent=1 // pred_check
      _
    $region19: #{tpu_custom_call.1} parent=1 // pred_check_branch
      %53 = sbr.rel (0) target = $region21
    $region20: #{tpu_custom_call.1} parent=1 // pred_region
      _
    $region21: #{tpu_custom_call.1} parent=1 // pred_fallthru
      _
    // Predicated region
    $region22: #{tpu_custom_call.1} parent=1 // pred_check
      _
    $region23: #{tpu_custom_call.1} parent=1 // pred_check_branch
      %55 = sbr.rel (0) target = $region25
    $region24: #{tpu_custom_call.1} parent=1 // pred_region
      %57 = dma.done [#allocation3], 64
    $region25: #{tpu_custom_call.1} parent=1 // pred_fallthru
      _
    // Predicated region
    $region26: #{tpu_custom_call.1} parent=1 // pred_check
      _
    $region27: #{tpu_custom_call.1} parent=1 // pred_check_branch
      %59 = sbr.rel (0) target = $region29
    $region28: #{tpu_custom_call.1} parent=1 // pred_region
      %61 = dma.done [#allocation6], 1024
    $region29: #{tpu_custom_call.1} parent=1 // pred_fallthru
      _
    // Predicated region
    $region30: #{tpu_custom_call.1} parent=1 // pred_check
      _
    $region31: #{tpu_custom_call.1} parent=1 // pred_check_branch
      %63 = sbr.rel (0) target = $region33
    $region32: #{tpu_custom_call.1} parent=1 // pred_region
      %65 = dma.done [#allocation6], 1024
    $region33: #{tpu_custom_call.1} parent=1 // pred_fallthru
      _
    %v66 = vld [vmem:[#allocation2] sm:$0xf]
    %v67 = vld [vmem:[#allocation5] sm:$0xf]
    %v68 = vld [vmem:[#allocation5 + $0x4] sm:$0xf]
    %v69 = vld [vmem:[#allocation5 + $0x8] sm:$0xf]
    %v70 = vld [vmem:[#allocation5 + $0xc] sm:$0xf]
    %v71 = vld [vmem:[#allocation5 + $0x10] sm:$0xf]
    %v72 = vld [vmem:[#allocation5 + $0x14] sm:$0xf]
    %v73 = vld [vmem:[#allocation5 + $0x18] sm:$0xf]
    %v74 = vld [vmem:[#allocation5 + $0x1c] sm:$0xf]
    %v75 = vld [vmem:[#allocation5 + $0x20] sm:$0xf]
    %v76 = vld [vmem:[#allocation5 + $0x24] sm:$0xf]
    %v77 = vld [vmem:[#allocation5 + $0x28] sm:$0xf]
    %v78 = vld [vmem:[#allocation5 + $0x2c] sm:$0xf]
    %v79 = vld [vmem:[#allocation5 + $0x30] sm:$0xf]
    %v80 = vld [vmem:[#allocation5 + $0x34] sm:$0xf]
    %v81 = vld [vmem:[#allocation5 + $0x38] sm:$0xf]
    %v82 = vld [vmem:[#allocation5 + $0x3c] sm:$0xf]
    %v83 = vld [vmem:[%s2] sm:$0x1]
    %v85 = vperm.slane %v83, 0
    %v103 = vunpack.c.l.b16 %v67
    %v104 = vunpack.c.l.b16 %v68
    %v105 = vunpack.c.l.b16 %v69
    %v106 = vunpack.c.l.b16 %v70
    %v107 = vunpack.c.l.b16 %v71
    %v108 = vunpack.c.l.b16 %v72
    %v109 = vunpack.c.l.b16 %v73
    %v110 = vunpack.c.l.b16 %v74
    %v111 = vunpack.c.l.b16 %v75
    %v112 = vunpack.c.l.b16 %v76
    %v113 = vunpack.c.l.b16 %v77
    %v114 = vunpack.c.l.b16 %v78
    %v115 = vunpack.c.l.b16 %v79
    %v116 = vunpack.c.l.b16 %v80
    %v117 = vunpack.c.l.b16 %v81
    %v118 = vunpack.c.l.b16 %v82
    %v119 = vpack.c.b16 %v104, %v103
    %v120 = vpack.c.b16 %v106, %v105
    %v121 = vpack.c.b16 %v108, %v107
    %v122 = vpack.c.b16 %v110, %v109
    %v123 = vpack.c.b16 %v112, %v111
    %v124 = vpack.c.b16 %v114, %v113
    %v125 = vpack.c.b16 %v116, %v115
    %v126 = vpack.c.b16 %v118, %v117
    %135 = vmatpush.bf16.msra.mxu0 %v126
    %136 = vmatpush.bf16.msra.mxu0 %v125
    %137 = vmatpush.bf16.msra.mxu0 %v124
    %138 = vmatpush.bf16.msra.mxu0 %v123
    %139 = vmatpush.bf16.msra.mxu0 %v122
    %140 = vmatpush.bf16.msra.mxu0 %v121
    %141 = vmatpush.bf16.msra.mxu0 %v120
    %142 = vmatpush.bf16.msra.mxu0 %v119
    %143 = vmatmul.bf16.gmra.mxu0 %v66
    %v144 = vpop.f32.mrf.mxu0
    %v145 = vadd.f32 %v85, %v144
    %v146 = vpop.f32.mrf.mxu0
    %147 = vdwg.mxu0
    %v148 = vmax.f32 %v145, 0.0
    %v149 = vld [vmem:[%s4] sm:$0x1]
    %v150 = vpack.c.bf16 %v148, %v148
    %v151 = vld [vmem:[#allocation7] sm:$0xf]
    %v152 = vld [vmem:[#allocation7 + $0x4] sm:$0xf]
    %v153 = vld [vmem:[#allocation7 + $0x8] sm:$0xf]
    %v154 = vld [vmem:[#allocation7 + $0xc] sm:$0xf]
    %v155 = vld [vmem:[#allocation7 + $0x10] sm:$0xf]
    %v156 = vld [vmem:[#allocation7 + $0x14] sm:$0xf]
    %v157 = vld [vmem:[#allocation7 + $0x18] sm:$0xf]
    %v158 = vld [vmem:[#allocation7 + $0x1c] sm:$0xf]
    %v159 = vld [vmem:[#allocation7 + $0x20] sm:$0xf]
    %v160 = vld [vmem:[#allocation7 + $0x24] sm:$0xf]
    %v161 = vld [vmem:[#allocation7 + $0x28] sm:$0xf]
    %v162 = vld [vmem:[#allocation7 + $0x2c] sm:$0xf]
    %v163 = vld [vmem:[#allocation7 + $0x30] sm:$0xf]
    %v164 = vld [vmem:[#allocation7 + $0x34] sm:$0xf]
    %v165 = vld [vmem:[#allocation7 + $0x38] sm:$0xf]
    %v166 = vld [vmem:[#allocation7 + $0x3c] sm:$0xf]
    %v183 = vunpack.c.l.b16 %v151
    %v184 = vunpack.c.l.b16 %v152
    %v185 = vunpack.c.l.b16 %v153
    %v186 = vunpack.c.l.b16 %v154
    %v187 = vunpack.c.l.b16 %v155
    %v188 = vunpack.c.l.b16 %v156
    %v189 = vunpack.c.l.b16 %v157
    %v190 = vunpack.c.l.b16 %v158
    %v191 = vunpack.c.l.b16 %v159
    %v192 = vunpack.c.l.b16 %v160
    %v193 = vunpack.c.l.b16 %v161
    %v194 = vunpack.c.l.b16 %v162
    %v195 = vunpack.c.l.b16 %v163
    %v196 = vunpack.c.l.b16 %v164
    %v197 = vunpack.c.l.b16 %v165
    %v198 = vunpack.c.l.b16 %v166
    %v199 = vpack.c.b16 %v184, %v183
    %v200 = vpack.c.b16 %v186, %v185
    %v201 = vpack.c.b16 %v188, %v187
    %v202 = vpack.c.b16 %v190, %v189
    %v203 = vpack.c.b16 %v192, %v191
    %v204 = vpack.c.b16 %v194, %v193
    %v205 = vpack.c.b16 %v196, %v195
    %v206 = vpack.c.b16 %v198, %v197
    %215 = vmatpush.bf16.msra.mxu0 %v206
    %216 = vmatpush.bf16.msra.mxu0 %v205
    %217 = vmatpush.bf16.msra.mxu0 %v204
    %218 = vmatpush.bf16.msra.mxu0 %v203
    %219 = vmatpush.bf16.msra.mxu0 %v202
    %220 = vmatpush.bf16.msra.mxu0 %v201
    %221 = vmatpush.bf16.msra.mxu0 %v200
    %222 = vmatpush.bf16.msra.mxu0 %v199
    %223 = vmatmul.bf16.gmra.mxu0 %v150
    %v224 = vpop.f32.mrf.mxu0
    %v225 = vadd.f32 0.0, %v224
    %v226 = vpop.f32.mrf.mxu0
    %227 = vdwg.mxu0
    %v229 = vperm.slane %v149, 0
    %v231 = vadd.f32 %v229, %v225
    %232 = vst [vmem:[#allocation8] sm:$0xff] %v231
    // Predicated region
    $region34: #{tpu_custom_call.1} parent=1 // pred_check
      _
    $region35: #{tpu_custom_call.1} parent=1 // pred_check_branch
      %234 = sbr.rel (0) target = $region37
    $region36: #{tpu_custom_call.1} parent=1 // pred_region
      %236 = vsyncadd [#allocation4], 0
      %s238 = sshll.u32 [#allocation8], 4
      %s239 = int_to_ptr.vmem [resolvable:$true] %s238
      %s240 = sshll.u32 %s5, 4
      %s241 = int_to_ptr.hbm [resolvable:$true] %s240
      %243 = dma.vmem_to_hbm [thread:$0]  %s239, 128, %s241, [#allocation4]
    $region37: #{tpu_custom_call.1} parent=1 // pred_fallthru
      _
    // Predicated region
    $region38: #{tpu_custom_call.1} parent=1 // pred_check
      _
    $region39: #{tpu_custom_call.1} parent=1 // pred_check_branch
      %245 = sbr.rel (0) target = $region41
    $region40: #{tpu_custom_call.1} parent=1 // pred_region
      %247 = dma.done [#allocation4], 128
    $region41: #{tpu_custom_call.1} parent=1 // pred_fallthru
      _
    %248 = vsyncpa [#allocation3], 1
    %249 = vsyncpa [#allocation6], 1
    %250 = vsyncpa [#allocation4], 1

</llo_original>
